<compile_context>
chip_gen: v6e
topology: v6e:2x2x1
jax: 0.10.0
libtpu: 0.0.40
codegen_flags: <defaults>
</compile_context>

<pallas_src>
import functools

import jax
import jax.numpy as jnp
from jax import lax
from jax.experimental import pallas as pl
from jax.experimental.pallas import tpu as pltpu

_VMEM_LIMIT_BYTES = 32 * 1024 * 1024   # fits v5e/v6e/v7x scoped-VMEM budgets


# ----------------------------------------------------------------------------
# Tiled linear (bf16 MXU operands, f32 accumulator)
# ----------------------------------------------------------------------------
def _matmul_kernel(x_ref, w_ref, o_ref, acc_ref):
    @pl.when(pl.program_id(2) == 0)
    def _():
        acc_ref[...] = jnp.zeros(acc_ref.shape, jnp.float32)

    acc_ref[...] += jnp.dot(x_ref[...], w_ref[...],
                            preferred_element_type=jnp.float32)

    @pl.when(pl.program_id(2) == pl.num_programs(2) - 1)
    def _():
        o_ref[...] = acc_ref[...].astype(o_ref.dtype)


def pallas_linear(x, w, *, tm=256, tn=256, tk=512, out_dtype=jnp.float32):
    m, k = x.shape
    k2, nf = w.shape
    assert k == k2
    x = x.astype(jnp.bfloat16)
    w = w.astype(jnp.bfloat16)
    tm, tn, tk = min(tm, m), min(tn, nf), min(tk, k)
    # TODO(synk): ragged-edge masking for dims not divisible by the tile sizes.
    assert m % tm == 0 and nf % tn == 0 and k % tk == 0
    grid = (m // tm, nf // tn, k // tk)
    return pl.pallas_call(
        _matmul_kernel,
        out_shape=jax.ShapeDtypeStruct((m, nf), out_dtype),
        grid_spec=pltpu.PrefetchScalarGridSpec(
            num_scalar_prefetch=0,
            grid=grid,
            in_specs=[pl.BlockSpec((tm, tk), lambda i, j, kk: (i, kk)),
                      pl.BlockSpec((tk, tn), lambda i, j, kk: (kk, j))],
            out_specs=pl.BlockSpec((tm, tn), lambda i, j, kk: (i, j)),
            scratch_shapes=[pltpu.VMEM((tm, tn), jnp.float32)]),
        compiler_params=pltpu.CompilerParams(
            dimension_semantics=("parallel", "parallel", "arbitrary"),
            vmem_limit_bytes=_VMEM_LIMIT_BYTES),
    )(x, w)


# ----------------------------------------------------------------------------
# GAT attention kernel: masked edge-softmax (online) + aggregation + bias + act
#   grid = (dst_tiles ["parallel"], src_tiles ["arbitrary"])
# ----------------------------------------------------------------------------
def _gat_attn_kernel(er_ref, el_ref, ft_ref, adj_ref, b_ref, o_ref,
                     m_ref, l_ref, acc_ref, *, num_heads, out_feats,
                     negative_slope, apply_relu, approx_recip):
    ks = pl.program_id(1)

    @pl.when(ks == 0)
    def _():
        m_ref[...] = jnp.full(m_ref.shape, -jnp.inf, jnp.float32)
        l_ref[...] = jnp.zeros(l_ref.shape, jnp.float32)
        acc_ref[...] = jnp.zeros(acc_ref.shape, jnp.float32)

    # Additive edge mask: 0 on edges, -1e30 elsewhere (head independent, hoisted).
    neg_mask = (adj_ref[...].astype(jnp.float32) - 1.0) * 1e30     # (T, Ts)

    for h in range(num_heads):                  # static unroll, small H
        d0 = h * out_feats
        er_h = er_ref[:, h:h + 1]               # (T, 1)   dst scores (f32)
        el_h = el_ref[h:h + 1, :]               # (1, Ts)  src scores (f32)
        s = er_h + el_h                         # (T, Ts)
        s = jnp.where(s > 0, s, negative_slope * s)   # LeakyReLU
        s = s + neg_mask                        # mask non-edges

        # Online (flash-style) softmax update. Rows with no edge in this src
        # tile contribute garbage that is wiped (alpha -> 0) once a real edge
        # appears; self-loops guarantee every row eventually has one.
        m_prev = m_ref[:, h:h + 1]
        m_new = jnp.maximum(m_prev, jnp.max(s, axis=-1, keepdims=True))
        alpha = jnp.exp(m_prev - m_new)
        p = jnp.exp(s - m_new)                  # <= 1, exact 0 on non-edges
        l_ref[:, h:h + 1] = alpha * l_ref[:, h:h + 1] + jnp.sum(
            p, axis=-1, keepdims=True)
        m_ref[:, h:h + 1] = m_new

        ft_h = ft_ref[:, d0:d0 + out_feats]     # (Ts, D) bf16
        acc_ref[:, d0:d0 + out_feats] = (
            alpha * acc_ref[:, d0:d0 + out_feats]
            + jnp.dot(p.astype(jnp.bfloat16), ft_h,
                      preferred_element_type=jnp.float32))

    @pl.when(ks == pl.num_programs(1) - 1)
    def _():
        # Normalize per head into the accumulator slab, then one dense store.
        for h in range(num_heads):
            d0 = h * out_feats
            acc_ref[:, d0:d0 + out_feats] = acc_ref[:, d0:d0 + out_feats] * (
                pl.reciprocal(l_ref[:, h:h + 1], approx=approx_recip))
        out = acc_ref[...] + b_ref[...]
        if apply_relu:
            out = jnp.maximum(out, 0.0)
        o_ref[...] = out.astype(o_ref.dtype)


def gat_conv(x, adj_i8, w_t, attn_l, attn_r, bias, num_heads, out_feats,
             apply_relu, negative_slope=0.2, out_dtype=jnp.float32,
             approx_recip=True, tile_dst=None, tile_src=None):
    """One GATConv layer = bf16 projection matmul + fused attention kernel."""
    n, fin = x.shape
    hd = num_heads * out_feats

    # Fold attn_l / attn_r into the projection so er/el fall out of the MXU
    # matmul: w_aug = [W^T | W^T.attn_r (er) | W^T.attn_l (el)].
    w3 = w_t.reshape(fin, num_heads, out_feats)
    w_er = jnp.einsum('fhd,hd->fh', w3, attn_r)        # dst scores columns
    w_el = jnp.einsum('fhd,hd->fh', w3, attn_l)        # src scores columns
    w_aug = jnp.concatenate([w_t, w_er, w_el], axis=1)  # (fin, hd + 2H)

    y = pallas_linear(x, w_aug)                        # f32 (n, hd + 2H)
    ft = y[:, :hd].astype(jnp.bfloat16)                # MXU-native aggregation operand
    er = y[:, hd:hd + num_heads]                       # (n, H)  f32 dst scores
    el_t = y[:, hd + num_heads:].T                     # (H, n)  f32 src scores
    b = bias.reshape(1, hd).astype(jnp.float32)

    if tile_dst is None:
        tile_dst = n if n <= 256 else 256
    if tile_src is None:
        tile_src = n if n <= 512 else 512
    # TODO(synk): ragged handling for n not divisible by the tile sizes.
    assert n % tile_dst == 0 and n % tile_src == 0
    grid = (n // tile_dst, n // tile_src)

    kernel = functools.partial(
        _gat_attn_kernel, num_heads=num_heads, out_feats=out_feats,
        negative_slope=negative_slope, apply_relu=apply_relu,
        approx_recip=approx_recip)

    # TODO(synk): pipeline_mode=pl.Buffered(1) on the grid-invariant bias and
    # bf16 exp on v6e/v7x are further (chip-conditional) VMEM/EUP savings.
    return pl.pallas_call(
        kernel,
        out_shape=jax.ShapeDtypeStruct((n, hd), out_dtype),
        grid_spec=pltpu.PrefetchScalarGridSpec(
            num_scalar_prefetch=0,
            grid=grid,
            in_specs=[
                pl.BlockSpec((tile_dst, num_heads), lambda i, k: (i, 0)),   # er (dst tile)
                pl.BlockSpec((num_heads, tile_src), lambda i, k: (0, k)),   # el^T (src tile)
                pl.BlockSpec((tile_src, hd), lambda i, k: (k, 0)),          # ft (src tile)
                pl.BlockSpec((tile_dst, tile_src), lambda i, k: (i, k)),    # adj block (int8)
                pl.BlockSpec((1, hd), lambda i, k: (0, 0)),                 # bias
            ],
            out_specs=pl.BlockSpec((tile_dst, hd), lambda i, k: (i, 0)),
            scratch_shapes=[
                pltpu.VMEM((tile_dst, num_heads), jnp.float32),   # running max m
                pltpu.VMEM((tile_dst, num_heads), jnp.float32),   # running denom l
                pltpu.VMEM((tile_dst, hd), jnp.float32),          # accumulator
            ]),
        compiler_params=pltpu.CompilerParams(
            dimension_semantics=("parallel", "arbitrary"),
            vmem_limit_bytes=_VMEM_LIMIT_BYTES),
    )(er, el_t, ft, adj_i8, b)


# ----------------------------------------------------------------------------
# Scaled cosine error loss
# ----------------------------------------------------------------------------
def _sce_kernel(x_ref, y_ref, o_ref, *, alpha):
    x = x_ref[...].astype(jnp.float32)
    y = y_ref[...].astype(jnp.float32)
    sx = jnp.sum(x * x, axis=-1, keepdims=True)
    sy = jnp.sum(y * y, axis=-1, keepdims=True)
    dot = jnp.sum(x * y, axis=-1, keepdims=True)
    # cos via per-row EUP rsqrts instead of two (M,F) divides.
    cos = dot * lax.rsqrt(jnp.maximum(sx, 1e-24)) * lax.rsqrt(jnp.maximum(sy, 1e-24))
    d = 1.0 - cos
    loss = d
    for _ in range(alpha - 1):
        loss = loss * d
    o_ref[...] = jnp.sum(loss, axis=0, keepdims=True) / x.shape[0]


def sce_loss(x_rec, x_init, alpha=2):
    # TODO(synk): tile over masked rows with an accumulator for very large
    # masked sets; a single VMEM block is fine at these sizes.
    out = pl.pallas_call(
        functools.partial(_sce_kernel, alpha=alpha),
        out_shape=jax.ShapeDtypeStruct((1, 1), jnp.float32),
        compiler_params=pltpu.CompilerParams(
            vmem_limit_bytes=_VMEM_LIMIT_BYTES),
    )(x_rec, x_init)
    return out[0, 0]


# ----------------------------------------------------------------------------
# Parameter init (deterministic, synthetic — xavier-normal-style)
# ----------------------------------------------------------------------------
def _xavier_normal(key, shape, fan_in, fan_out, gain):
    std = gain * (2.0 / (fan_in + fan_out)) ** 0.5
    return std * jax.random.normal(key, shape, jnp.float32)


def init_params(key, in_dim, num_hidden, num_layers, nhead, nhead_out):
    gain = 2.0 ** 0.5
    enc_hidden = num_hidden // nhead            # per-head hidden size
    keys = list(jax.random.split(key, 4 * num_layers + 8))
    ki = iter(keys)

    encoder = []
    fin = in_dim
    for _ in range(num_layers):
        fout = nhead * enc_hidden
        encoder.append(dict(
            w=_xavier_normal(next(ki), (fin, fout), fin, fout, gain),   # W^T layout
            attn_l=_xavier_normal(next(ki), (nhead, enc_hidden),
                                  nhead * enc_hidden, enc_hidden, gain),
            attn_r=_xavier_normal(next(ki), (nhead, enc_hidden),
                                  nhead * enc_hidden, enc_hidden, gain),
            bias=jnp.zeros((nhead * enc_hidden,), jnp.float32),
            heads=nhead, out_feats=enc_hidden,
        ))
        fin = fout

    # decoder: single GATConv(num_hidden -> in_dim, heads=nhead_out), no activation
    decoder = dict(
        w=_xavier_normal(next(ki), (num_hidden, nhead_out * in_dim),
                         num_hidden, nhead_out * in_dim, gain),
        attn_l=_xavier_normal(next(ki), (nhead_out, in_dim),
                              nhead_out * in_dim, in_dim, gain),
        attn_r=_xavier_normal(next(ki), (nhead_out, in_dim),
                              nhead_out * in_dim, in_dim, gain),
        bias=jnp.zeros((nhead_out * in_dim,), jnp.float32),
        heads=nhead_out, out_feats=in_dim,
    )

    enc2dec_w = _xavier_normal(next(ki), (num_hidden, num_hidden),
                               num_hidden, num_hidden, 1.0)
    enc_mask_token = jnp.zeros((1, in_dim), jnp.float32)

    return dict(encoder=encoder, decoder=decoder, enc2dec_w=enc2dec_w,
                enc_mask_token=enc_mask_token)


# ----------------------------------------------------------------------------
# PreModel forward (mask_attr_prediction)
# ----------------------------------------------------------------------------
def premodel_forward(params, adj_i8, x, key, mask_rate=0.3, replace_rate=0.1,
                     alpha_l=2):
    n, _ = x.shape

    # ---- encoding_mask_noise (random masking; plain-JAX glue) ----
    k1, k2, k3 = jax.random.split(key, 3)
    perm = jax.random.permutation(k1, n)
    num_mask = int(mask_rate * n)
    mask_nodes = perm[:num_mask]

    # NOTE: num_token + num_noise may be < num_mask due to int() rounding; this
    # matches the reference GraphMAE behavior (a few masked nodes stay as-is).
    num_noise = int(replace_rate * num_mask)
    num_token = int((1.0 - replace_rate) * num_mask)
    perm_mask = jax.random.permutation(k2, num_mask)
    token_nodes = mask_nodes[perm_mask[:num_token]]
    noise_nodes = mask_nodes[perm_mask[num_mask - num_noise:]]
    noise_src = jax.random.permutation(k3, n)[:num_noise]

    use_x = x.at[token_nodes].set(0.0)
    use_x = use_x.at[noise_nodes].set(x[noise_src])
    use_x = use_x.at[token_nodes].add(params['enc_mask_token'][0])

    # ---- encoder (GATConv per layer, relu + concat heads; bf16 activations) --
    h = use_x
    for lp in params['encoder']:
        h = gat_conv(h, adj_i8, lp['w'], lp['attn_l'], lp['attn_r'], lp['bias'],
                     lp['heads'], lp['out_feats'], apply_relu=True,
                     out_dtype=jnp.bfloat16, approx_recip=True)
    enc_rep = h

    # ---- encoder_to_decoder (tiled bf16 linear, no bias) ----
    rep = pallas_linear(enc_rep, params['enc2dec_w'])
    rep = rep.at[mask_nodes].set(0.0)          # re-mask before decoding

    # ---- decoder (single GATConv, no activation, exact softmax recip) ----
    dp = params['decoder']
    recon = gat_conv(rep, adj_i8, dp['w'], dp['attn_l'], dp['attn_r'], dp['bias'],
                     dp['heads'], dp['out_feats'], apply_relu=False,
                     out_dtype=jnp.float32, approx_recip=False)

    # ---- SCE loss on masked nodes ----
    x_init = x[mask_nodes]
    x_rec = recon[mask_nodes]
    return sce_loss(x_rec, x_init, alpha=alpha_l)


# ----------------------------------------------------------------------------
if __name__ == "__main__":
    N = 64          # nodes
    IN_DIM = 32
    NUM_HIDDEN = 32
    NUM_LAYERS = 2
    NHEAD = 4
    NHEAD_OUT = 1   # decoder heads (so recon matches in_dim for the loss)

    key = jax.random.PRNGKey(0)
    kx, kg, kp, km = jax.random.split(key, 4)

    # node features
    x = jax.random.normal(kx, (N, IN_DIM), jnp.float32)

    # synthetic graph: random directed edges + self-loops; adj[dst, src], int8 mask
    adj = jax.random.uniform(kg, (N, N)) < 0.15
    adj = jnp.logical_or(adj, jnp.eye(N, dtype=bool)).astype(jnp.int8)

    params = init_params(kp, IN_DIM, NUM_HIDDEN, NUM_LAYERS, NHEAD, NHEAD_OUT)

    loss = premodel_forward(params, adj, x, km)
    loss = jax.block_until_ready(loss)
    assert bool(jnp.isfinite(loss)), f"non-finite loss: {loss}"
    print("KERNEL_OK")
</pallas_src>

<mosaic_0001>
module attributes {stable_mosaic.version = 11 : i64} {
  func.func @_matmul_kernel(%arg0: i32, %arg1: i32, %arg2: i32, %arg3: memref<64x32xbf16, #tpu.memory_space<vmem>>, %arg4: memref<32x40xbf16, #tpu.memory_space<vmem>>, %arg5: memref<64x40xf32, #tpu.memory_space<vmem>>, %arg6: memref<64x40xf32, #tpu.memory_space<vmem>>) attributes {dimension_semantics = [#tpu.dimension_semantics<parallel>, #tpu.dimension_semantics<parallel>, #tpu.dimension_semantics<arbitrary>], iteration_bounds = array<i64: 1, 1, 1>, scalar_prefetch = 0 : i64, scratch_operands = 1 : i64, tpu.core_type = #tpu.core_type<tc>, window_params = [{transform_indices = @transform_0, window_bounds = array<i64: 64, 32>}, {transform_indices = @transform_1, window_bounds = array<i64: 32, 40>}, {transform_indices = @transform_2, window_bounds = array<i64: 64, 40>}]} {
    %c0_i32 = arith.constant 0 : i32
    %0 = arith.cmpi eq, %arg2, %c0_i32 : i32
    %1 = arith.extui %0 : i1 to i32
    %c0_i32_0 = arith.constant 0 : i32
    %2 = arith.cmpi ne, %1, %c0_i32_0 : i32
    scf.if %2 {
      %cst_10 = arith.constant 0.000000e+00 : f32
      %12 = vector.broadcast %cst_10 : f32 to vector<64x40xf32>
      %c0_11 = arith.constant 0 : index
      %c0_12 = arith.constant 0 : index
      %13 = vector.load %arg6[%c0_11, %c0_12] : memref<64x40xf32, #tpu.memory_space<vmem>>, vector<64x40xf32>
      tpu.vector_store %arg6[%c0_11, %c0_12], %12 {strides = array<i32>} : memref<64x40xf32, #tpu.memory_space<vmem>>, vector<64x40xf32>,
    } else {
    }
    %c0 = arith.constant 0 : index
    %c0_1 = arith.constant 0 : index
    %3 = vector.load %arg6[%c0, %c0_1] : memref<64x40xf32, #tpu.memory_space<vmem>>, vector<64x40xf32>
    %c0_2 = arith.constant 0 : index
    %c0_3 = arith.constant 0 : index
    %4 = vector.load %arg3[%c0_2, %c0_3] : memref<64x32xbf16, #tpu.memory_space<vmem>>, vector<64x32xbf16>
    %c0_4 = arith.constant 0 : index
    %c0_5 = arith.constant 0 : index
    %5 = vector.load %arg4[%c0_4, %c0_5] : memref<32x40xbf16, #tpu.memory_space<vmem>>, vector<32x40xbf16>
    %cst = arith.constant dense<0.000000e+00> : vector<64x40xf32>
    %6 = tpu.matmul %4, %5, %cst {dimension_numbers = #tpu.dot_dimension_numbers<[1], [0], [0], [1], [0, 0, 1, 1], [], []>} : vector<64x32xbf16>, vector<32x40xbf16>, vector<64x40xf32> -> vector<64x40xf32>
    %7 = arith.addf %3, %6 : vector<64x40xf32>
    %c0_6 = arith.constant 0 : index
    %c0_7 = arith.constant 0 : index
    %8 = vector.load %arg6[%c0_6, %c0_7] : memref<64x40xf32, #tpu.memory_space<vmem>>, vector<64x40xf32>
    tpu.vector_store %arg6[%c0_6, %c0_7], %7 {strides = array<i32>} : memref<64x40xf32, #tpu.memory_space<vmem>>, vector<64x40xf32>,
    %c0_i32_8 = arith.constant 0 : i32
    %9 = arith.cmpi eq, %arg2, %c0_i32_8 : i32
    %10 = arith.extui %9 : i1 to i32
    %c0_i32_9 = arith.constant 0 : i32
    %11 = arith.cmpi ne, %10, %c0_i32_9 : i32
    scf.if %11 {
      %c0_10 = arith.constant 0 : index
      %c0_11 = arith.constant 0 : index
      %12 = vector.load %arg6[%c0_10, %c0_11] : memref<64x40xf32, #tpu.memory_space<vmem>>, vector<64x40xf32>
      %c0_12 = arith.constant 0 : index
      %c0_13 = arith.constant 0 : index
      %13 = vector.load %arg5[%c0_12, %c0_13] : memref<64x40xf32, #tpu.memory_space<vmem>>, vector<64x40xf32>
      tpu.vector_store %arg5[%c0_12, %c0_13], %12 {strides = array<i32>} : memref<64x40xf32, #tpu.memory_space<vmem>>, vector<64x40xf32>,
    } else {
    }
    return
  }
  func.func @transform_0(%arg0: i32, %arg1: i32, %arg2: i32) -> (i32, i32) {
    %c0_i32 = arith.constant 0 : i32
    return %arg0, %arg2 : i32, i32
  }
  func.func @transform_1(%arg0: i32, %arg1: i32, %arg2: i32) -> (i32, i32) {
    %c0_i32 = arith.constant 0 : i32
    return %arg2, %arg1 : i32, i32
  }
  func.func @transform_2(%arg0: i32, %arg1: i32, %arg2: i32) -> (i32, i32) {
    %c0_i32 = arith.constant 0 : i32
    return %arg0, %arg1 : i32, i32
  }
}

</mosaic_0001>

<llo_original>
// kernel: tpu_custom_call.1
$region0: #{tpu_custom_call.1}
  #allocation0 [shape = 'u32[]', space=smem, size = 0x4, offset = 0x4, fixed_abs, tag = 'smem constant byte address 0x4 - core index']
  #allocation1 [shape = 'u32[144,128]{1,0:T(1,128)}', space=vmem, size = 0x12000, scoped, tag = 'internal scratch']
  #allocation2 [shape = 'f32[64,40]{1,0:T(8,128)}', space=vmem, size = 0x8000, scoped, tag = 'scratch operand']
  %s0 = inlined_call_operand.vmem [shape: bf16[64,32], index: 0, kind: input, shape index: {}]
  %s1 = inlined_call_operand.vmem [shape: bf16[32,40], index: 1, kind: input, shape index: {}]
  %s2 = inlined_call_operand.vmem [shape: f32[64,40], index: 2, kind: output, shape index: {}]
  %s3 = sld [smem:[#allocation0]]
  $region26: #{tpu_custom_call.1} parent=0
    _
  %s5 = ssub.s32 1, %s3
  %s6 = scalar_select 0, %s5, %s3
  // Predicated region
  $region2: #{tpu_custom_call.1} parent=0 // pred_check
    _
  $region3: #{tpu_custom_call.1} parent=0 // pred_check_branch
    %8 = sbr.rel (0) target = $region5
  $region4: #{tpu_custom_call.1} parent=0 // pred_region
    _
  $region5: #{tpu_custom_call.1} parent=0 // pred_fallthru
    _
  // Predicated region
  $region6: #{tpu_custom_call.1} parent=0 // pred_check
    _
  $region7: #{tpu_custom_call.1} parent=0 // pred_check_branch
    %10 = sbr.rel (0) target = $region9
  $region8: #{tpu_custom_call.1} parent=0 // pred_region
    _
  $region9: #{tpu_custom_call.1} parent=0 // pred_fallthru
    _
  %p12 = scmp.eq.s32.totalorder 0, 0
  // Predicated region
  $region10: #{tpu_custom_call.1} parent=0 // pred_check
    %p13 = pneg %p12
  $region11: #{tpu_custom_call.1} parent=0 // pred_check_branch
    %15 = sbr.rel (%p13) target = $region13
  $region12: #{tpu_custom_call.1} parent=0 // pred_region
    %vm16 = vcmask 326656
    %17 = vst.msk [vmem:[#allocation2] sm:$0xff] %vm16, 0.0
    %18 = vst.msk [vmem:[#allocation2 + $0x8] sm:$0xff] %vm16, 0.0
    %19 = vst.msk [vmem:[#allocation2 + $0x10] sm:$0xff] %vm16, 0.0
    %20 = vst.msk [vmem:[#allocation2 + $0x18] sm:$0xff] %vm16, 0.0
    %21 = vst.msk [vmem:[#allocation2 + $0x20] sm:$0xff] %vm16, 0.0
    %22 = vst.msk [vmem:[#allocation2 + $0x28] sm:$0xff] %vm16, 0.0
    %23 = vst.msk [vmem:[#allocation2 + $0x30] sm:$0xff] %vm16, 0.0
    %24 = vst.msk [vmem:[#allocation2 + $0x38] sm:$0xff] %vm16, 0.0
  $region13: #{tpu_custom_call.1} parent=0 // pred_fallthru
    _
  %v25 = vld [vmem:[#allocation2] sm:$0xff]
  %v26 = vld [vmem:[#allocation2 + $0x8] sm:$0xff]
  %v27 = vld [vmem:[#allocation2 + $0x10] sm:$0xff]
  %v28 = vld [vmem:[#allocation2 + $0x18] sm:$0xff]
  %v29 = vld [vmem:[#allocation2 + $0x20] sm:$0xff]
  %v30 = vld [vmem:[#allocation2 + $0x28] sm:$0xff]
  %v31 = vld [vmem:[#allocation2 + $0x30] sm:$0xff]
  %v32 = vld [vmem:[#allocation2 + $0x38] sm:$0xff]
  %v33 = vld [vmem:[%s0] sm:$0xf]
  %v34 = vld [vmem:[%s0 + $0x4] sm:$0xf]
  %v35 = vld [vmem:[%s0 + $0x8] sm:$0xf]
  %v36 = vld [vmem:[%s0 + $0xc] sm:$0xf]
  %v37 = vld [vmem:[%s0 + $0x10] sm:$0xf]
  %v38 = vld [vmem:[%s0 + $0x14] sm:$0xf]
  %v39 = vld [vmem:[%s0 + $0x18] sm:$0xf]
  %v40 = vld [vmem:[%s0 + $0x1c] sm:$0xf]
  %v41 = vld [vmem:[%s1] sm:$0xf]
  %v42 = vld [vmem:[%s1 + $0x4] sm:$0xf]
  %v43 = vld [vmem:[%s1 + $0x8] sm:$0xf]
  %v44 = vld [vmem:[%s1 + $0xc] sm:$0xf]
  %v53 = vunpack.c.l.b16 %v33
  %v54 = vunpack.c.l.b16 %v34
  %v55 = vunpack.c.l.b16 %v35
  %v56 = vunpack.c.l.b16 %v36
  %v57 = vunpack.c.l.b16 %v37
  %v58 = vunpack.c.l.b16 %v38
  %v59 = vunpack.c.l.b16 %v39
  %v60 = vunpack.c.l.b16 %v40
  %v61 = vpack.c.b16 %v54, %v53
  %v62 = vpack.c.b16 %v56, %v55
  %v63 = vpack.c.b16 %v58, %v57
  %v64 = vpack.c.b16 %v60, %v59
  %v69 = vunpack.c.l.b16 %v41
  %v70 = vunpack.c.l.b16 %v42
  %v71 = vunpack.c.l.b16 %v43
  %v72 = vunpack.c.l.b16 %v44
  %v73 = vpack.c.b16 %v70, %v69
  %v74 = vpack.c.b16 %v72, %v71
  %vm77 = vcmask 261120
  %v79 = vsel %vm77, %v61, 0
  %v82 = vsel %vm77, %v62, 0
  %v85 = vsel %vm77, %v63, 0
  %v88 = vsel %vm77, %v64, 0
  %90 = vmatprep.subr.bf16.mxu0 0
  %91 = vmatpush1.bf16.msra.mxu0 0
  %92 = vmatprep.subr.bf16.mxu0 0
  %93 = vmatpush1.bf16.msra.mxu0 0
  %94 = vmatprep.subr.bf16.mxu0 0
  %95 = vmatpush1.bf16.msra.mxu0 0
  %96 = vmatprep.subr.bf16.mxu0 0
  %97 = vmatpush1.bf16.msra.mxu0 0
  %98 = vmatprep.subr.bf16.mxu0 0
  %99 = vmatpush1.bf16.msra.mxu0 0
  %100 = vmatprep.subr.bf16.mxu0 0
  %101 = vmatpush1.bf16.msra.mxu0 0
  %102 = vmatprep.subr.bf16.mxu0 0
  %103 = vmatpush1.bf16.msra.mxu0 %v74
  %104 = vmatprep.subr.bf16.mxu0 0
  %105 = vmatpush1.bf16.msra.mxu0 %v73
  %106 = vmatprep.subr.bf16.mxu0 0
  %107 = vmatpush2.bf16.msra.mxu0 0
  %108 = vmatprep.subr.bf16.mxu0 0
  %109 = vmatpush2.bf16.msra.mxu0 0
  %110 = vmatprep.subr.bf16.mxu0 0
  %111 = vmatpush2.bf16.msra.mxu0 0
  %112 = vmatprep.subr.bf16.mxu0 0
  %113 = vmatpush2.bf16.msra.mxu0 0
  %114 = vmatprep.subr.bf16.mxu0 0
  %115 = vmatpush2.bf16.msra.mxu0 0
  %116 = vmatprep.subr.bf16.mxu0 0
  %117 = vmatpush2.bf16.msra.mxu0 0
  %118 = vmatprep.subr.bf16.mxu0 0
  %119 = vmatpush2.bf16.msra.mxu0 0
  %120 = vmatprep.subr.bf16.mxu0 0
  %121 = vmatpush2.bf16.msra.mxu0 0
  %122 = vmatprep.mubr.bf16.mxu0 0
  %123 = vmatmul.mubr.bf16.gmra.mxu0 %v79
  %v124 = vpop.f32.mrf.mxu0
  %v125 = vadd.f32 0.0, %v124
  %v126 = vpop.f32.mrf.mxu0
  %v127 = vpop.f32.mrf.mxu0
  %v128 = vadd.f32 0.0, %v127
  %v129 = vpop.f32.mrf.mxu0
  %130 = vmatprep.mubr.bf16.mxu0 0
  %131 = vmatmul.mubr.bf16.gmra.mxu0 %v82
  %v132 = vpop.f32.mrf.mxu0
  %v133 = vadd.f32 0.0, %v132
  %v134 = vpop.f32.mrf.mxu0
  %v135 = vpop.f32.mrf.mxu0
  %v136 = vadd.f32 0.0, %v135
  %v137 = vpop.f32.mrf.mxu0
  %138 = vmatprep.mubr.bf16.mxu0 0
  %139 = vmatmul.mubr.bf16.gmra.mxu0 %v85
  %v140 = vpop.f32.mrf.mxu0
  %v141 = vadd.f32 0.0, %v140
  %v142 = vpop.f32.mrf.mxu0
  %v143 = vpop.f32.mrf.mxu0
  %v144 = vadd.f32 0.0, %v143
  %v145 = vpop.f32.mrf.mxu0
  %146 = vmatprep.mubr.bf16.mxu0 0
  %147 = vmatmul.mubr.bf16.gmra.mxu0 %v88
  %v148 = vpop.f32.mrf.mxu0
  %v149 = vadd.f32 0.0, %v148
  %v150 = vpop.f32.mrf.mxu0
  %v151 = vpop.f32.mrf.mxu0
  %v152 = vadd.f32 0.0, %v151
  %v153 = vpop.f32.mrf.mxu0
  %154 = vdwg.mxu0
  %v155 = vadd.f32 %v25, %v125
  %v156 = vadd.f32 %v26, %v128
  %v157 = vadd.f32 %v27, %v133
  %v158 = vadd.f32 %v28, %v136
  %v159 = vadd.f32 %v29, %v141
  %v160 = vadd.f32 %v30, %v144
  %v161 = vadd.f32 %v31, %v149
  %v162 = vadd.f32 %v32, %v152
  %vm163 = vcmask 326656
  %164 = vst.msk [vmem:[#allocation2] sm:$0xff] %vm163, %v155
  %165 = vst.msk [vmem:[#allocation2 + $0x8] sm:$0xff] %vm163, %v156
  %166 = vst.msk [vmem:[#allocation2 + $0x10] sm:$0xff] %vm163, %v157
  %167 = vst.msk [vmem:[#allocation2 + $0x18] sm:$0xff] %vm163, %v158
  %168 = vst.msk [vmem:[#allocation2 + $0x20] sm:$0xff] %vm163, %v159
  %169 = vst.msk [vmem:[#allocation2 + $0x28] sm:$0xff] %vm163, %v160
  %170 = vst.msk [vmem:[#allocation2 + $0x30] sm:$0xff] %vm163, %v161
  %171 = vst.msk [vmem:[#allocation2 + $0x38] sm:$0xff] %vm163, %v162
  // Predicated region
  $region14: #{tpu_custom_call.1} parent=0 // pred_check
    %p172 = pneg %p12
  $region15: #{tpu_custom_call.1} parent=0 // pred_check_branch
    %174 = sbr.rel (%p172) target = $region17
  $region16: #{tpu_custom_call.1} parent=0 // pred_region
    %v175 = vld [vmem:[#allocation2] sm:$0xff]
    %v176 = vld [vmem:[#allocation2 + $0x8] sm:$0xff]
    %v177 = vld [vmem:[#allocation2 + $0x10] sm:$0xff]
    %v178 = vld [vmem:[#allocation2 + $0x18] sm:$0xff]
    %v179 = vld [vmem:[#allocation2 + $0x20] sm:$0xff]
    %v180 = vld [vmem:[#allocation2 + $0x28] sm:$0xff]
    %v181 = vld [vmem:[#allocation2 + $0x30] sm:$0xff]
    %v182 = vld [vmem:[#allocation2 + $0x38] sm:$0xff]
    %183 = vst.msk [vmem:[%s2] sm:$0xff] %vm163, %v175
    %184 = vst.msk [vmem:[%s2 + $0x8] sm:$0xff] %vm163, %v176
    %185 = vst.msk [vmem:[%s2 + $0x10] sm:$0xff] %vm163, %v177
    %186 = vst.msk [vmem:[%s2 + $0x18] sm:$0xff] %vm163, %v178
    %187 = vst.msk [vmem:[%s2 + $0x20] sm:$0xff] %vm163, %v179
    %188 = vst.msk [vmem:[%s2 + $0x28] sm:$0xff] %vm163, %v180
    %189 = vst.msk [vmem:[%s2 + $0x30] sm:$0xff] %vm163, %v181
    %190 = vst.msk [vmem:[%s2 + $0x38] sm:$0xff] %vm163, %v182
  $region17: #{tpu_custom_call.1} parent=0 // pred_fallthru
    _
  // Predicated region
  $region18: #{tpu_custom_call.1} parent=0 // pred_check
    _
  $region19: #{tpu_custom_call.1} parent=0 // pred_check_branch
    %192 = sbr.rel (0) target = $region21
  $region20: #{tpu_custom_call.1} parent=0 // pred_region
    _
  $region21: #{tpu_custom_call.1} parent=0 // pred_fallthru
    _
  // Predicated region
  $region22: #{tpu_custom_call.1} parent=0 // pred_check
    _
  $region23: #{tpu_custom_call.1} parent=0 // pred_check_branch
    %194 = sbr.rel (0) target = $region25
  $region24: #{tpu_custom_call.1} parent=0 // pred_region
    _
  $region25: #{tpu_custom_call.1} parent=0 // pred_fallthru
    _

</llo_original>
